<compile_context>
chip_gen: v7x
topology: tpu7x:2x2x1
jax: 0.10.0
libtpu: 0.0.40
codegen_flags: <defaults>
</compile_context>

<pallas_src>
import functools

import numpy as np
import jax
import jax.numpy as jnp
from jax.experimental import pallas as pl
from jax.experimental.pallas import tpu as pltpu


def _adaptive_pool_matrix(in_size: int, out_size: int) -> np.ndarray:
    """Row o holds weight 1/len over the adaptive-pool window for output o."""
    m = np.zeros((out_size, in_size), dtype=np.float32)
    for o in range(out_size):
        start = (o * in_size) // out_size                 # floor
        end = -((-(o + 1) * in_size) // out_size)         # ceil
        m[o, start:end] = 1.0 / float(end - start)
    return m


def _round_up(x: int, m: int) -> int:
    return ((x + m - 1) // m) * m


def _tiny_image_kernel(x_ref, k_ref, o_ref, acc_ref, *, valid_hw, tk):
    # x_ref: (tb, tk)  k_ref: (tk, p_out)  o_ref: (tb, p_out)  acc: f32 (tb, p_out)
    kidx = pl.program_id(1)

    @pl.when(kidx == 0)
    def _():
        acc_ref[...] = jnp.zeros_like(acc_ref)

    x = x_ref[...]
    if valid_hw is not None:
        # Ragged last K chunk: zero columns past the true H*W extent so the
        # garbage read from the out-of-bounds window contributes nothing.
        col = jax.lax.broadcasted_iota(jnp.int32, x.shape, dimension=1)
        valid = valid_hw - kidx * tk
        x = jnp.where(col < valid, x, jnp.zeros_like(x))

    acc_ref[...] += jnp.dot(x, k_ref[...], preferred_element_type=jnp.float32)

    @pl.when(kidx == pl.num_programs(1) - 1)
    def _():
        o_ref[...] = acc_ref[...].astype(o_ref.dtype)


def tiny_image_forward(x: jax.Array, grid_size=(5, 5)) -> jax.Array:
    assert x.ndim == 4, f"Input should have 4 dimensions. Was {x.ndim}"
    # TODO(synk): kmain.pixel_values_check(x, (0, 1)) is a host-side assert in
    # the original module; range checking is done in the test harness instead.
    N, C, H, W = x.shape
    OH, OW = grid_size
    hw = H * W
    p = OH * OW
    nc = N * C
    x_itemsize = jnp.dtype(x.dtype).itemsize

    # Weight dtype: bf16 weights for bf16 inputs (native MXU rate, no upcast of
    # the big X tile); f32 weights otherwise for exact AdaptiveAvgPool2d parity.
    k_dtype = jnp.bfloat16 if x.dtype == jnp.bfloat16 else jnp.float32
    k_itemsize = jnp.dtype(k_dtype).itemsize

    # Output lane padding only for large images (unmasked lane-dense stores).
    pad_out = hw >= 1024
    p_out = 128 if pad_out else p

    # K (= H*W) tiling: single block for moderate images, 2048-wide chunks for
    # large ones so the lane-padded weight / input blocks stay bounded in VMEM.
    TK_MAX = 2048
    if hw <= 4096:
        tk, nk = hw, 1
    else:
        tk = TK_MAX
        nk = pl.cdiv(hw, tk)
    hw_k = nk * tk

    # Fused pooling weights: kron(A, B)[oh*OW+ow, h*W+w] = A[oh,h] * B[ow,w].
    a = _adaptive_pool_matrix(H, OH)                      # (OH, H)
    b = _adaptive_pool_matrix(W, OW)                      # (OW, W)
    k_np = np.kron(a, b).T.astype(np.float32)             # (hw, p)
    if p_out != p:
        k_np = np.pad(k_np, ((0, 0), (0, p_out - p)))     # zero output lanes
    if hw_k != hw:
        k_np = np.pad(k_np, ((0, hw_k - hw), (0, 0)))     # zero weights for OOB K
    k_t = jnp.asarray(k_np, dtype=k_dtype)                # (hw_k, p_out)

    # Batch tile: ~8 MiB input block, dtype-aware sublane rounding; shrink so
    # small problems still yield >=2 grid steps (megacore) when possible.
    sublane = max(8, 32 // x_itemsize)                    # 8 f32 / 16 bf16 / 32 i8
    budget = 8 * 1024 * 1024
    bytes_per_row = _round_up(tk, 128) * x_itemsize
    tb = max(sublane, (budget // bytes_per_row) // sublane * sublane)
    half = _round_up(-(-nc // 2), sublane)
    tb = min(tb, max(sublane, half), _round_up(nc, sublane))
    nb = pl.cdiv(nc, tb)

    need_mask = (hw % tk) != 0
    kernel = functools.partial(
        _tiny_image_kernel, valid_hw=hw if need_mask else None, tk=tk
    )

    # Explicit VMEM budget: 2x double-buffered input block + weight block +
    # output block (all lane-padded) + f32 accumulator, plus margin.
    p_lane = _round_up(p_out, 128)
    vmem_bytes = (
        2 * tb * _round_up(tk, 128) * x_itemsize
        + 2 * tk * p_lane * k_itemsize
        + 2 * tb * p_lane * x_itemsize
        + tb * p_lane * 4
    )
    vmem_limit = min(max(vmem_bytes + (4 << 20), 32 << 20), 48 << 20)

    cost = pl.CostEstimate(
        flops=2 * nc * hw * p_out,
        transcendentals=0,
        bytes_accessed=(
            nc * hw * x_itemsize           # X read
            + nc * p_out * x_itemsize      # output write
            + hw_k * p_out * k_itemsize    # weight read
        ),
    )

    out = pl.pallas_call(
        kernel,
        out_shape=jax.ShapeDtypeStruct((nc, p_out), x.dtype),
        grid=(nb, nk),
        in_specs=[
            pl.BlockSpec((tb, tk), lambda i, k: (i, k)),      # batch x K tiled X
            pl.BlockSpec((tk, p_out), lambda i, k: (k, 0)),   # K-tiled weights
        ],
        out_specs=pl.BlockSpec((tb, p_out), lambda i, k: (i, 0)),
        scratch_shapes=[pltpu.VMEM((tb, p_out), jnp.float32)],
        compiler_params=pltpu.CompilerParams(
            dimension_semantics=("parallel", "arbitrary"),    # reduction axis last
            vmem_limit_bytes=vmem_limit,
        ),
        cost_estimate=cost,
    )(x.reshape(nc, hw), k_t)                                 # free NCHW reshape

    if p_out != p:
        out = out[:, :p]
    # output.view(N, -1)
    return out.reshape(N, C * p)


def _reference(x, grid_size=(5, 5)):
    """Pure-JAX reference for adaptive avg pool + flatten."""
    N, C, H, W = x.shape
    OH, OW = grid_size
    a = jnp.asarray(_adaptive_pool_matrix(H, OH))
    b = jnp.asarray(_adaptive_pool_matrix(W, OW))
    out = jnp.einsum("oh,nchw,pw->ncop", a, x.astype(jnp.float32), b)
    return out.reshape(N, -1).astype(x.dtype)


if __name__ == "__main__":
    key = jax.random.PRNGKey(0)
    N, C, H, W = 2, 4, 16, 16
    # Values in [0, 1] to satisfy the module's pixel_values_check(x, (0, 1)).
    x = jax.random.uniform(key, (N, C, H, W), dtype=jnp.float32, minval=0.0, maxval=1.0)
    assert x.ndim == 4
    assert float(x.min()) >= 0.0 and float(x.max()) <= 1.0  # pixel_values_check

    y = tiny_image_forward(x, grid_size=(5, 5))
    y = jax.block_until_ready(y)

    y_ref = _reference(x, grid_size=(5, 5))
    np.testing.assert_allclose(np.asarray(y), np.asarray(y_ref), rtol=1e-5, atol=1e-5)
    assert y.shape == (N, C * 5 * 5)

    print("KERNEL_OK")
</pallas_src>

<mosaic_0001>
module attributes {stable_mosaic.version = 11 : i64} {
  func.func @_tiny_image_kernel(%arg0: i32, %arg1: i32, %arg2: memref<8x256xf32, #tpu.memory_space<vmem>>, %arg3: memref<256x25xf32, #tpu.memory_space<vmem>>, %arg4: memref<8x25xf32, #tpu.memory_space<vmem>>, %arg5: memref<8x25xf32, #tpu.memory_space<vmem>>) attributes {dimension_semantics = [#tpu.dimension_semantics<parallel>, #tpu.dimension_semantics<arbitrary>], iteration_bounds = array<i64: 1, 1>, scalar_prefetch = 0 : i64, scratch_operands = 1 : i64, tpu.core_type = #tpu.core_type<tc>, window_params = [{transform_indices = @transform_0, window_bounds = array<i64: 8, 256>}, {transform_indices = @transform_1, window_bounds = array<i64: 256, 25>}, {transform_indices = @transform_2, window_bounds = array<i64: 8, 25>}]} {
    %c0_i32 = arith.constant 0 : i32
    %0 = arith.cmpi eq, %arg1, %c0_i32 : i32
    %1 = arith.extui %0 : i1 to i32
    %c0_i32_0 = arith.constant 0 : i32
    %2 = arith.cmpi ne, %1, %c0_i32_0 : i32
    scf.if %2 {
      %cst_10 = arith.constant 0.000000e+00 : f32
      %12 = vector.broadcast %cst_10 : f32 to vector<8x25xf32>
      %c0_11 = arith.constant 0 : index
      %c0_12 = arith.constant 0 : index
      %13 = vector.load %arg5[%c0_11, %c0_12] : memref<8x25xf32, #tpu.memory_space<vmem>>, vector<8x25xf32>
      tpu.vector_store %arg5[%c0_11, %c0_12], %12 {strides = array<i32>} : memref<8x25xf32, #tpu.memory_space<vmem>>, vector<8x25xf32>,
    } else {
    }
    %c0 = arith.constant 0 : index
    %c0_1 = arith.constant 0 : index
    %3 = vector.load %arg2[%c0, %c0_1] : memref<8x256xf32, #tpu.memory_space<vmem>>, vector<8x256xf32>
    %c0_2 = arith.constant 0 : index
    %c0_3 = arith.constant 0 : index
    %4 = vector.load %arg5[%c0_2, %c0_3] : memref<8x25xf32, #tpu.memory_space<vmem>>, vector<8x25xf32>
    %c0_4 = arith.constant 0 : index
    %c0_5 = arith.constant 0 : index
    %5 = vector.load %arg3[%c0_4, %c0_5] : memref<256x25xf32, #tpu.memory_space<vmem>>, vector<256x25xf32>
    %cst = arith.constant dense<0.000000e+00> : vector<8x25xf32>
    %6 = tpu.matmul %3, %5, %cst {dimension_numbers = #tpu.dot_dimension_numbers<[1], [0], [0], [1], [0, 0, 1, 1], [], []>} : vector<8x256xf32>, vector<256x25xf32>, vector<8x25xf32> -> vector<8x25xf32>
    %7 = arith.addf %4, %6 : vector<8x25xf32>
    %c0_6 = arith.constant 0 : index
    %c0_7 = arith.constant 0 : index
    %8 = vector.load %arg5[%c0_6, %c0_7] : memref<8x25xf32, #tpu.memory_space<vmem>>, vector<8x25xf32>
    tpu.vector_store %arg5[%c0_6, %c0_7], %7 {strides = array<i32>} : memref<8x25xf32, #tpu.memory_space<vmem>>, vector<8x25xf32>,
    %c0_i32_8 = arith.constant 0 : i32
    %9 = arith.cmpi eq, %arg1, %c0_i32_8 : i32
    %10 = arith.extui %9 : i1 to i32
    %c0_i32_9 = arith.constant 0 : i32
    %11 = arith.cmpi ne, %10, %c0_i32_9 : i32
    scf.if %11 {
      %c0_10 = arith.constant 0 : index
      %c0_11 = arith.constant 0 : index
      %12 = vector.load %arg5[%c0_10, %c0_11] : memref<8x25xf32, #tpu.memory_space<vmem>>, vector<8x25xf32>
      %c0_12 = arith.constant 0 : index
      %c0_13 = arith.constant 0 : index
      %13 = vector.load %arg4[%c0_12, %c0_13] : memref<8x25xf32, #tpu.memory_space<vmem>>, vector<8x25xf32>
      tpu.vector_store %arg4[%c0_12, %c0_13], %12 {strides = array<i32>} : memref<8x25xf32, #tpu.memory_space<vmem>>, vector<8x25xf32>,
    } else {
    }
    return
  }
  func.func @transform_0(%arg0: i32, %arg1: i32) -> (i32, i32) {
    %c0_i32 = arith.constant 0 : i32
    return %arg0, %arg1 : i32, i32
  }
  func.func @transform_1(%arg0: i32, %arg1: i32) -> (i32, i32) {
    %c0_i32 = arith.constant 0 : i32
    %c0_i32_0 = arith.constant 0 : i32
    return %arg1, %c0_i32 : i32, i32
  }
  func.func @transform_2(%arg0: i32, %arg1: i32) -> (i32, i32) {
    %c0_i32 = arith.constant 0 : i32
    %c0_i32_0 = arith.constant 0 : i32
    return %arg0, %c0_i32 : i32, i32
  }
}

</mosaic_0001>

<llo_original>
// kernel: tpu_custom_call.1
$region0: #{tpu_custom_call.1}
  #allocation0 [shape = 'u32[]', space=smem, size = 0x4, offset = 0x4, fixed_abs, tag = 'smem constant byte address 0x4 - core index']
  #allocation1 [shape = 'u32[144,128]{1,0:T(1,128)}', space=vmem, size = 0x12000, scoped, tag = 'internal scratch']
  #allocation2 [shape = 'f32[8,25]{1,0:T(8,128)}', space=vmem, size = 0x1000, scoped, tag = 'scratch operand']
  %s0 = inlined_call_operand.vmem [shape: f32[8,256], index: 0, kind: input, shape index: {}]
  %s1 = inlined_call_operand.vmem [shape: f32[256,25], index: 1, kind: input, shape index: {}]
  %s2 = inlined_call_operand.hbm [shape: f32[8,25], index: 2, kind: output, shape index: {}]
  %s3 = sld [smem:[#allocation0]]
  $region26: #{tpu_custom_call.1} parent=0
    _
  %s5 = ssub.s32 1, %s3
  %s6 = scalar_select 0, %s5, %s3
  $region1: #{tpu_custom_call.1} parent=0
    #allocation3 [shape = 'u8[4096]{0}', space=vmem, size = 0x1000, scoped, tag = 'output window, operand 0, single buffered']
    #allocation4 [shape = 's32[1]{0}', space=sflag, size = 0x4, scoped, tag = 'scoped memory for tpu_custom_call.1']
    %7 = vsyncpa [#allocation4], 0
    // Predicated region
    $region2: #{tpu_custom_call.1} parent=1 // pred_check
      _
    $region3: #{tpu_custom_call.1} parent=1 // pred_check_branch
      %9 = sbr.rel (0) target = $region5
    $region4: #{tpu_custom_call.1} parent=1 // pred_region
      _
    $region5: #{tpu_custom_call.1} parent=1 // pred_fallthru
      _
    // Predicated region
    $region6: #{tpu_custom_call.1} parent=1 // pred_check
      _
    $region7: #{tpu_custom_call.1} parent=1 // pred_check_branch
      %11 = sbr.rel (0) target = $region9
    $region8: #{tpu_custom_call.1} parent=1 // pred_region
      _
    $region9: #{tpu_custom_call.1} parent=1 // pred_fallthru
      _
    %p12 = scmp.eq.s32.totalorder 0, 0
    // Predicated region
    $region10: #{tpu_custom_call.1} parent=1 // pred_check
      %p13 = pneg %p12
    $region11: #{tpu_custom_call.1} parent=1 // pred_check_branch
      %15 = sbr.rel (%p13) target = $region13
    $region12: #{tpu_custom_call.1} parent=1 // pred_region
      %vm16 = vcmask 203776
      %17 = vst.msk [vmem:[#allocation2] sm:$0xff] %vm16, 0.0
    $region13: #{tpu_custom_call.1} parent=1 // pred_fallthru
      _
    %v18 = vld [vmem:[%s0] sm:$0xff]
    %v19 = vld [vmem:[%s0 + $0x8] sm:$0xff]
    %v20 = vld [vmem:[#allocation2] sm:$0xff]
    %v21 = vld [vmem:[%s1] sm:$0xff]
    %v22 = vld [vmem:[%s1 + $0x8] sm:$0xff]
    %v23 = vld [vmem:[%s1 + $0x10] sm:$0xff]
    %v24 = vld [vmem:[%s1 + $0x18] sm:$0xff]
    %v25 = vld [vmem:[%s1 + $0x20] sm:$0xff]
    %v26 = vld [vmem:[%s1 + $0x28] sm:$0xff]
    %v27 = vld [vmem:[%s1 + $0x30] sm:$0xff]
    %v28 = vld [vmem:[%s1 + $0x38] sm:$0xff]
    %v29 = vld [vmem:[%s1 + $0x40] sm:$0xff]
    %v30 = vld [vmem:[%s1 + $0x48] sm:$0xff]
    %v31 = vld [vmem:[%s1 + $0x50] sm:$0xff]
    %v32 = vld [vmem:[%s1 + $0x58] sm:$0xff]
    %v33 = vld [vmem:[%s1 + $0x60] sm:$0xff]
    %v34 = vld [vmem:[%s1 + $0x68] sm:$0xff]
    %v35 = vld [vmem:[%s1 + $0x70] sm:$0xff]
    %v36 = vld [vmem:[%s1 + $0x78] sm:$0xff]
    %v37 = vld [vmem:[%s1 + $0x80] sm:$0xff]
    %v38 = vld [vmem:[%s1 + $0x88] sm:$0xff]
    %v39 = vld [vmem:[%s1 + $0x90] sm:$0xff]
    %v40 = vld [vmem:[%s1 + $0x98] sm:$0xff]
    %v41 = vld [vmem:[%s1 + $0xa0] sm:$0xff]
    %v42 = vld [vmem:[%s1 + $0xa8] sm:$0xff]
    %v43 = vld [vmem:[%s1 + $0xb0] sm:$0xff]
    %v44 = vld [vmem:[%s1 + $0xb8] sm:$0xff]
    %v45 = vld [vmem:[%s1 + $0xc0] sm:$0xff]
    %v46 = vld [vmem:[%s1 + $0xc8] sm:$0xff]
    %v47 = vld [vmem:[%s1 + $0xd0] sm:$0xff]
    %v48 = vld [vmem:[%s1 + $0xd8] sm:$0xff]
    %v49 = vld [vmem:[%s1 + $0xe0] sm:$0xff]
    %v50 = vld [vmem:[%s1 + $0xe8] sm:$0xff]
    %v51 = vld [vmem:[%s1 + $0xf0] sm:$0xff]
    %v52 = vld [vmem:[%s1 + $0xf8] sm:$0xff]
    %53 = vmatprep.subr.mxu0 0.0
    %54 = vmatpush1.msra.mxu0 %v21
    %55 = vmatprep.subr.mxu0 0.0
    %56 = vmatpush1.msra.mxu0 %v22
    %57 = vmatprep.subr.mxu0 0.0
    %58 = vmatpush1.msra.mxu0 %v23
    %59 = vmatprep.subr.mxu0 0.0
    %60 = vmatpush1.msra.mxu0 %v24
    %61 = vmatprep.subr.mxu0 0.0
    %62 = vmatpush1.msra.mxu0 %v25
    %63 = vmatprep.subr.mxu0 0.0
    %64 = vmatpush1.msra.mxu0 %v26
    %65 = vmatprep.subr.mxu0 0.0
    %66 = vmatpush1.msra.mxu0 %v27
    %67 = vmatprep.subr.mxu0 0.0
    %68 = vmatpush1.msra.mxu0 %v28
    %69 = vmatprep.subr.mxu0 0.0
    %70 = vmatpush1.msra.mxu0 %v29
    %71 = vmatprep.subr.mxu0 0.0
    %72 = vmatpush1.msra.mxu0 %v30
    %73 = vmatprep.subr.mxu0 0.0
    %74 = vmatpush1.msra.mxu0 %v31
    %75 = vmatprep.subr.mxu0 0.0
    %76 = vmatpush1.msra.mxu0 %v32
    %77 = vmatprep.subr.mxu0 0.0
    %78 = vmatpush1.msra.mxu0 %v33
    %79 = vmatprep.subr.mxu0 0.0
    %80 = vmatpush1.msra.mxu0 %v34
    %81 = vmatprep.subr.mxu0 0.0
    %82 = vmatpush1.msra.mxu0 %v35
    %83 = vmatprep.subr.mxu0 0.0
    %84 = vmatpush1.msra.mxu0 %v36
    %85 = vmatprep.subr.mxu0 0.0
    %86 = vmatpush1.msra.mxu0 %v37
    %87 = vmatprep.subr.mxu0 0.0
    %88 = vmatpush1.msra.mxu0 %v38
    %89 = vmatprep.subr.mxu0 0.0
    %90 = vmatpush1.msra.mxu0 %v39
    %91 = vmatprep.subr.mxu0 0.0
    %92 = vmatpush1.msra.mxu0 %v40
    %93 = vmatprep.subr.mxu0 0.0
    %94 = vmatpush1.msra.mxu0 %v41
    %95 = vmatprep.subr.mxu0 0.0
    %96 = vmatpush1.msra.mxu0 %v42
    %97 = vmatprep.subr.mxu0 0.0
    %98 = vmatpush1.msra.mxu0 %v43
    %99 = vmatprep.subr.mxu0 0.0
    %100 = vmatpush1.msra.mxu0 %v44
    %101 = vmatprep.subr.mxu0 0.0
    %102 = vmatpush1.msra.mxu0 %v45
    %103 = vmatprep.subr.mxu0 0.0
    %104 = vmatpush1.msra.mxu0 %v46
    %105 = vmatprep.subr.mxu0 0.0
    %106 = vmatpush1.msra.mxu0 %v47
    %107 = vmatprep.subr.mxu0 0.0
    %108 = vmatpush1.msra.mxu0 %v48
    %109 = vmatprep.subr.mxu0 0.0
    %110 = vmatpush1.msra.mxu0 %v49
    %111 = vmatprep.subr.mxu0 0.0
    %112 = vmatpush1.msra.mxu0 %v50
    %113 = vmatprep.subr.mxu0 0.0
    %114 = vmatpush1.msra.mxu0 %v51
    %115 = vmatprep.subr.mxu0 0.0
    %116 = vmatpush1.msra.mxu0 %v52
    %117 = vmatprep.mubr.f32.mxu0 %v19
    %118 = vmatmul.mubr.f32.gmra.mrb[0].mxu0 %v18
    %v119 = vpop.f32.mrb[0].mxu0
    %v120 = vadd.f32 0.0, %v119
    %v121 = vpop.f32.mrb[0].mxu0
    %122 = vdwg.mxu0
    %v123 = vadd.f32 %v20, %v120
    %vm124 = vcmask 203776
    %125 = vst.msk [vmem:[#allocation2] sm:$0xff] %vm124, %v123
    // Predicated region
    $region14: #{tpu_custom_call.1} parent=1 // pred_check
      %p126 = pneg %p12
    $region15: #{tpu_custom_call.1} parent=1 // pred_check_branch
      %128 = sbr.rel (%p126) target = $region17
    $region16: #{tpu_custom_call.1} parent=1 // pred_region
      %v129 = vld [vmem:[#allocation2] sm:$0xff]
      %130 = vst.msk [vmem:[#allocation3] sm:$0xff] %vm124, %v129
    $region17: #{tpu_custom_call.1} parent=1 // pred_fallthru
      _
    // Predicated region
    $region18: #{tpu_custom_call.1} parent=1 // pred_check
      _
    $region19: #{tpu_custom_call.1} parent=1 // pred_check_branch
      %132 = sbr.rel (0) target = $region21
    $region20: #{tpu_custom_call.1} parent=1 // pred_region
      %s134 = ssub.s32 128, 128
      %135 = vsyncadd [#allocation4], %s134
      %s137 = sshll.u32 [#allocation3], 4
      %s138 = int_to_ptr.vmem [resolvable:$true] %s137
      %140 = dma.vmem_to_hbm [thread:$0]  %s138, 128, %s2, [#allocation4]
    $region21: #{tpu_custom_call.1} parent=1 // pred_fallthru
      _
    // Predicated region
    $region22: #{tpu_custom_call.1} parent=1 // pred_check
      _
    $region23: #{tpu_custom_call.1} parent=1 // pred_check_branch
      %142 = sbr.rel (0) target = $region25
    $region24: #{tpu_custom_call.1} parent=1 // pred_region
      %143 = dma.done [#allocation4], 128
    $region25: #{tpu_custom_call.1} parent=1 // pred_fallthru
      _
    %144 = vsyncpa [#allocation4], 1

</llo_original>
